<compile_context>
chip_gen: v6e
topology: v6e:2x2x1
jax: 0.10.0
libtpu: 0.0.40
codegen_flags: <defaults>
</compile_context>

<pallas_src>
import functools

import jax
import jax.numpy as jnp
from jax.experimental import pallas as pl
from jax.experimental.pallas import tpu as pltpu


def _make_cdq_kernel(two_w: float, tile_v: int, vocab: int, needs_v_mask: bool):
    neg_inf = float("-inf")

    def kernel(qi_ref, ids_ref, out_ref, m_ref, l_ref, sel_ref, msk_ref, lane_ref):
        # qi_ref : (1, tT, 2*tV) channel-interleaved logits (ch0 on even lanes)
        # ids_ref: (1, tT, 1) int32 target token ids
        # out_ref: (1, tT, 1) f32
        # m/l/sel: (1, tT, 1) f32 running max / sum-exp / selected sum-exp
        # msk_ref: (1, 1, 2*tV) f32  1.0 on valid channel-0 lanes else 0.0
        # lane_ref:(1, 1, 2*tV) int32 lane index within a chunk
        v = pl.program_id(2)
        nv = pl.num_programs(2)

        @pl.when(v == 0)
        def _init():
            m_ref[...] = jnp.full_like(m_ref, neg_inf)
            l_ref[...] = jnp.zeros_like(l_ref)
            sel_ref[...] = jnp.zeros_like(sel_ref)
            lane = jax.lax.broadcasted_iota(jnp.int32, lane_ref.shape, 2)
            lane_ref[...] = lane
            msk_ref[...] = jnp.where((lane & 1) == 0, 1.0, 0.0).astype(jnp.float32)

        if needs_v_mask:
            # Ragged vocab: fold the out-of-vocab bound into the mask for the
            # final (partial) chunk only -- earlier chunks pay nothing extra.
            @pl.when(v == nv - 1)
            def _fold_bound():
                lane = lane_ref[...]
                in_vocab = (v * (2 * tile_v) + lane) < (2 * vocab)
                msk_ref[...] = jnp.where(
                    ((lane & 1) == 0) & in_vocab, 1.0, 0.0
                ).astype(jnp.float32)

        x = qi_ref[...].astype(jnp.float32)               # (1, tT, 2*tV)
        valid = msk_ref[...] != 0.0                       # (1, 1, 2*tV), bcast
        x_m = jnp.where(valid, x, neg_inf)                # robust to junk lanes

        # Online softmax update (channel-1 / padded lanes are -inf -> exp()=0).
        m_prev = m_ref[...]
        m_new = jnp.maximum(m_prev, jnp.max(x_m, axis=-1, keepdims=True))
        alpha = jnp.exp(m_prev - m_new)
        e = jnp.exp(x_m - m_new)
        l_ref[...] = alpha * l_ref[...] + jnp.sum(e, axis=-1, keepdims=True)

        # Gather: the interleaved lane of this chunk holding the target token.
        # (per-row scalar math stays on (1, tT, 1) row vregs)
        sel_lane = 2 * (ids_ref[...] - v * tile_v)
        hit = lane_ref[...] == sel_lane                   # (1, tT, 2*tV)
        sel_ref[...] = alpha * sel_ref[...] + jnp.sum(
            jnp.where(hit, e, 0.0), axis=-1, keepdims=True
        )
        m_ref[...] = m_new

        @pl.when(v == nv - 1)
        def _finalize():
            out_ref[...] = (two_w * sel_ref[...] / l_ref[...]).astype(out_ref.dtype)

    return kernel


@functools.partial(jax.jit, static_argnames=("weight", "tile_t", "tile_v"))
def cdq_loss(q, input_ids, *, weight=-1.0, tile_t=256, tile_v=4096):
    """q: [B, S, V, 2] float, input_ids: [B, S] int -> [B, S-1] float32."""
    B, S, V, C = q.shape
    assert C == 2
    T = S - 1

    # Row tile: full S when it fits, otherwise an 8-aligned tile.
    if S <= tile_t:
        tT = S
    else:
        assert tile_t % 8 == 0
        tT = tile_t
    # Megacore: ensure >= 2 parallel (b, t) blocks when possible (v7x has 2 TCs).
    if B * pl.cdiv(T, tT) < 2:
        half = max(8, ((T + 15) // 16) * 8)   # ~T/2 rounded up to a multiple of 8
        if half < tT:
            tT = half
    nT = pl.cdiv(T, tT)

    # Vocab tile: full V when it fits, otherwise 2*tV must be lane aligned.
    if V <= tile_v:
        tV = V
    else:
        assert tile_v % 64 == 0
        tV = tile_v
    nV = pl.cdiv(V, tV)
    needs_v_mask = (V % tV) != 0

    # Contiguous channel-interleaved view of q (free reshape; ch0 on even lanes).
    qi = q.reshape(B, S, 2 * V)
    # ids/out carry S rows so every BlockSpec dim is a multiple of 8 or the full
    # dim; the final (shifted-off) row is computed and discarded.
    ids = jnp.pad(input_ids[:, 1:], ((0, 0), (0, 1))).astype(jnp.int32)[..., None]

    kernel = _make_cdq_kernel(2.0 * float(weight), tV, V, needs_v_mask)

    cost = pl.CostEstimate(
        flops=10 * B * T * V,
        transcendentals=2 * B * T * V,          # exp runs over both channels
        bytes_accessed=B * T * 2 * V * q.dtype.itemsize + 2 * B * T * 4,
    )

    out = pl.pallas_call(
        kernel,
        out_shape=jax.ShapeDtypeStruct((B, S, 1), jnp.float32),
        grid_spec=pltpu.PrefetchScalarGridSpec(
            num_scalar_prefetch=0,
            grid=(B, nT, nV),
            in_specs=[
                pl.BlockSpec((1, tT, 2 * tV), lambda b, t, v: (b, t, v)),
                pl.BlockSpec((1, tT, 1), lambda b, t, v: (b, t, 0)),
            ],
            out_specs=pl.BlockSpec((1, tT, 1), lambda b, t, v: (b, t, 0)),
            scratch_shapes=[
                pltpu.VMEM((1, tT, 1), jnp.float32),      # running max
                pltpu.VMEM((1, tT, 1), jnp.float32),      # running sum-exp
                pltpu.VMEM((1, tT, 1), jnp.float32),      # selected sum-exp
                pltpu.VMEM((1, 1, 2 * tV), jnp.float32),  # channel/vocab mask
                pltpu.VMEM((1, 1, 2 * tV), jnp.int32),    # lane iota
            ],
        ),
        compiler_params=pltpu.CompilerParams(
            dimension_semantics=("parallel", "parallel", "arbitrary"),
            vmem_limit_bytes=48 * 1024 * 1024,
        ),
        cost_estimate=cost,
    )(qi, ids)

    return out.reshape(B, S)[:, :T]


def cdq_loss_ref(q, input_ids, weight=-1.0):
    logits = q[:, :-1, :, 0].astype(jnp.float32)
    probs = jax.nn.softmax(logits, axis=-1)
    ids = input_ids[:, 1:].astype(jnp.int32)
    sel = jnp.take_along_axis(probs, ids[..., None], axis=-1)[..., 0]
    return weight * (sel + sel)


if __name__ == "__main__":
    key = jax.random.PRNGKey(0)
    k1, k2, k3, k4, k5, k6 = jax.random.split(key, 6)

    # 1) Small shape: one (T, V) block per batch element.
    B, S, V = 2, 8, 128
    q = jax.random.normal(k1, (B, S, V, 2), dtype=jnp.float32)
    input_ids = jax.random.randint(k2, (B, S), 0, V, dtype=jnp.int32)
    out = cdq_loss(q, input_ids, weight=-1.0)
    jax.block_until_ready(out)
    ref = cdq_loss_ref(q, input_ids, weight=-1.0)
    assert out.shape == (B, S - 1)
    assert jnp.allclose(out, ref, atol=1e-5, rtol=1e-5), (out, ref)

    # 2) Tiled online-softmax path: multiple T and V tiles, ragged (masked)
    #    last V chunk and partial last T tile.
    B2, S2, V2 = 2, 20, 320
    q2 = jax.random.normal(k3, (B2, S2, V2, 2), dtype=jnp.float32)
    ids2 = jax.random.randint(k4, (B2, S2), 0, V2, dtype=jnp.int32)
    out2 = cdq_loss(q2, ids2, weight=-1.0, tile_t=8, tile_v=128)
    jax.block_until_ready(out2)
    ref2 = cdq_loss_ref(q2, ids2, weight=-1.0)
    assert out2.shape == (B2, S2 - 1)
    assert jnp.allclose(out2, ref2, atol=1e-5, rtol=1e-5), (out2, ref2)

    # 3) B=1: exercises the megacore split heuristic (tT is shrunk so nT >= 2).
    B3, S3, V3 = 1, 40, 256
    q3 = jax.random.normal(k5, (B3, S3, V3, 2), dtype=jnp.float32)
    ids3 = jax.random.randint(k6, (B3, S3), 0, V3, dtype=jnp.int32)
    out3 = cdq_loss(q3, ids3, weight=-1.0)
    jax.block_until_ready(out3)
    ref3 = cdq_loss_ref(q3, ids3, weight=-1.0)
    assert out3.shape == (B3, S3 - 1)
    assert jnp.allclose(out3, ref3, atol=1e-5, rtol=1e-5), (out3, ref3)

    print("KERNEL_OK")
</pallas_src>

<mosaic_0001>
module attributes {stable_mosaic.version = 11 : i64} {
  func.func @kernel(%arg0: i32, %arg1: i32, %arg2: i32, %arg3: memref<1x8x256xf32, #tpu.memory_space<vmem>>, %arg4: memref<1x8x1xi32, #tpu.memory_space<vmem>>, %arg5: memref<1x8x1xf32, #tpu.memory_space<vmem>>, %arg6: memref<1x8x1xf32, #tpu.memory_space<vmem>>, %arg7: memref<1x8x1xf32, #tpu.memory_space<vmem>>, %arg8: memref<1x8x1xf32, #tpu.memory_space<vmem>>, %arg9: memref<1x1x256xf32, #tpu.memory_space<vmem>>, %arg10: memref<1x1x256xi32, #tpu.memory_space<vmem>>) attributes {dimension_semantics = [#tpu.dimension_semantics<parallel>, #tpu.dimension_semantics<parallel>, #tpu.dimension_semantics<arbitrary>], iteration_bounds = array<i64: 2, 1, 1>, scalar_prefetch = 0 : i64, scratch_operands = 5 : i64, tpu.core_type = #tpu.core_type<tc>, window_params = [{transform_indices = @transform_0, window_bounds = array<i64: 1, 8, 256>}, {transform_indices = @transform_1, window_bounds = array<i64: 1, 8, 1>}, {transform_indices = @transform_2, window_bounds = array<i64: 1, 8, 1>}]} {
    %c0_i32 = arith.constant 0 : i32
    %0 = arith.cmpi eq, %arg2, %c0_i32 : i32
    %1 = arith.extui %0 : i1 to i32
    %c0_i32_0 = arith.constant 0 : i32
    %2 = arith.cmpi ne, %1, %c0_i32_0 : i32
    scf.if %2 {
      %cst_37 = arith.constant 0xFF800000 : f32
      %48 = vector.broadcast %cst_37 : f32 to vector<1x8x1xf32>
      %c0_38 = arith.constant 0 : index
      %c0_39 = arith.constant 0 : index
      %c0_40 = arith.constant 0 : index
      %49 = vector.load %arg6[%c0_38, %c0_39, %c0_40] : memref<1x8x1xf32, #tpu.memory_space<vmem>>, vector<1x8x1xf32>
      tpu.vector_store %arg6[%c0_38, %c0_39, %c0_40], %48 {strides = array<i32>} : memref<1x8x1xf32, #tpu.memory_space<vmem>>, vector<1x8x1xf32>,
      %cst_41 = arith.constant 0.000000e+00 : f32
      %50 = vector.broadcast %cst_41 : f32 to vector<1x8x1xf32>
      %c0_42 = arith.constant 0 : index
      %c0_43 = arith.constant 0 : index
      %c0_44 = arith.constant 0 : index
      %51 = vector.load %arg7[%c0_42, %c0_43, %c0_44] : memref<1x8x1xf32, #tpu.memory_space<vmem>>, vector<1x8x1xf32>
      tpu.vector_store %arg7[%c0_42, %c0_43, %c0_44], %50 {strides = array<i32>} : memref<1x8x1xf32, #tpu.memory_space<vmem>>, vector<1x8x1xf32>,
      %cst_45 = arith.constant 0.000000e+00 : f32
      %52 = vector.broadcast %cst_45 : f32 to vector<1x8x1xf32>
      %c0_46 = arith.constant 0 : index
      %c0_47 = arith.constant 0 : index
      %c0_48 = arith.constant 0 : index
      %53 = vector.load %arg8[%c0_46, %c0_47, %c0_48] : memref<1x8x1xf32, #tpu.memory_space<vmem>>, vector<1x8x1xf32>
      tpu.vector_store %arg8[%c0_46, %c0_47, %c0_48], %52 {strides = array<i32>} : memref<1x8x1xf32, #tpu.memory_space<vmem>>, vector<1x8x1xf32>,
      %54 = tpu.iota {dimensions = array<i32: 2>} : vector<1x1x256xi32>
      %c0_49 = arith.constant 0 : index
      %c0_50 = arith.constant 0 : index
      %c0_51 = arith.constant 0 : index
      %55 = vector.load %arg10[%c0_49, %c0_50, %c0_51] : memref<1x1x256xi32, #tpu.memory_space<vmem>>, vector<1x1x256xi32>
      tpu.vector_store %arg10[%c0_49, %c0_50, %c0_51], %54 {strides = array<i32>} : memref<1x1x256xi32, #tpu.memory_space<vmem>>, vector<1x1x256xi32>,
      %c1_i32 = arith.constant 1 : i32
      %56 = vector.broadcast %c1_i32 : i32 to vector<1x1x256xi32>
      %57 = arith.andi %54, %56 : vector<1x1x256xi32>
      %c0_i32_52 = arith.constant 0 : i32
      %58 = vector.broadcast %c0_i32_52 : i32 to vector<1x1x256xi32>
      %59 = arith.cmpi eq, %57, %58 : vector<1x1x256xi32>
      %cst_53 = arith.constant 1.000000e+00 : f32
      %cst_54 = arith.constant 0.000000e+00 : f32
      %60 = vector.broadcast %cst_53 : f32 to vector<1x1x256xf32>
      %61 = vector.broadcast %cst_54 : f32 to vector<1x1x256xf32>
      %62 = arith.select %59, %60, %61 : vector<1x1x256xi1>, vector<1x1x256xf32>
      %c0_55 = arith.constant 0 : index
      %c0_56 = arith.constant 0 : index
      %c0_57 = arith.constant 0 : index
      %63 = vector.load %arg9[%c0_55, %c0_56, %c0_57] : memref<1x1x256xf32, #tpu.memory_space<vmem>>, vector<1x1x256xf32>
      tpu.vector_store %arg9[%c0_55, %c0_56, %c0_57], %62 {strides = array<i32>} : memref<1x1x256xf32, #tpu.memory_space<vmem>>, vector<1x1x256xf32>,
    } else {
    }
    %c0 = arith.constant 0 : index
    %c0_1 = arith.constant 0 : index
    %c0_2 = arith.constant 0 : index
    %3 = vector.load %arg3[%c0, %c0_1, %c0_2] : memref<1x8x256xf32, #tpu.memory_space<vmem>>, vector<1x8x256xf32>
    %c0_3 = arith.constant 0 : index
    %c0_4 = arith.constant 0 : index
    %c0_5 = arith.constant 0 : index
    %4 = vector.load %arg9[%c0_3, %c0_4, %c0_5] : memref<1x1x256xf32, #tpu.memory_space<vmem>>, vector<1x1x256xf32>
    %cst = arith.constant 0.000000e+00 : f32
    %5 = vector.broadcast %cst : f32 to vector<1x1x256xf32>
    %6 = arith.cmpf one, %4, %5 : vector<1x1x256xf32>
    %cst_6 = arith.constant 0xFF800000 : f32
    %7 = vector.shape_cast %6 : vector<1x1x256xi1> to vector<1x1x256xi1>
    %8 = vector.broadcast %7 : vector<1x1x256xi1> to vector<1x8x256xi1>
    %9 = vector.broadcast %cst_6 : f32 to vector<1x8x256xf32>
    %10 = arith.select %8, %3, %9 : vector<1x8x256xi1>, vector<1x8x256xf32>
    %c0_7 = arith.constant 0 : index
    %c0_8 = arith.constant 0 : index
    %c0_9 = arith.constant 0 : index
    %11 = vector.load %arg6[%c0_7, %c0_8, %c0_9] : memref<1x8x1xf32, #tpu.memory_space<vmem>>, vector<1x8x1xf32>
    %cst_10 = arith.constant dense<0xFF800000> : vector<1x8xf32>
    %12 = vector.multi_reduction <maximumf>, %10, %cst_10 [2] : vector<1x8x256xf32> to vector<1x8xf32>
    %13 = vector.shape_cast %12 : vector<1x8xf32> to vector<1x8x1xf32>
    %14 = arith.maximumf %11, %13 : vector<1x8x1xf32>
    %15 = arith.subf %11, %14 : vector<1x8x1xf32>
    %16 = math.exp %15 : vector<1x8x1xf32>
    %17 = vector.broadcast %14 : vector<1x8x1xf32> to vector<1x8x256xf32>
    %18 = arith.subf %10, %17 : vector<1x8x256xf32>
    %19 = math.exp %18 : vector<1x8x256xf32>
    %c0_11 = arith.constant 0 : index
    %c0_12 = arith.constant 0 : index
    %c0_13 = arith.constant 0 : index
    %20 = vector.load %arg7[%c0_11, %c0_12, %c0_13] : memref<1x8x1xf32, #tpu.memory_space<vmem>>, vector<1x8x1xf32>
    %21 = arith.mulf %16, %20 : vector<1x8x1xf32>
    %cst_14 = arith.constant dense<0.000000e+00> : vector<1x8xf32>
    %22 = vector.multi_reduction <add>, %19, %cst_14 [2] : vector<1x8x256xf32> to vector<1x8xf32>
    %23 = vector.shape_cast %22 : vector<1x8xf32> to vector<1x8x1xf32>
    %24 = arith.addf %21, %23 : vector<1x8x1xf32>
    %c0_15 = arith.constant 0 : index
    %c0_16 = arith.constant 0 : index
    %c0_17 = arith.constant 0 : index
    %25 = vector.load %arg7[%c0_15, %c0_16, %c0_17] : memref<1x8x1xf32, #tpu.memory_space<vmem>>, vector<1x8x1xf32>
    tpu.vector_store %arg7[%c0_15, %c0_16, %c0_17], %24 {strides = array<i32>} : memref<1x8x1xf32, #tpu.memory_space<vmem>>, vector<1x8x1xf32>,
    %c0_18 = arith.constant 0 : index
    %c0_19 = arith.constant 0 : index
    %c0_20 = arith.constant 0 : index
    %26 = vector.load %arg4[%c0_18, %c0_19, %c0_20] : memref<1x8x1xi32, #tpu.memory_space<vmem>>, vector<1x8x1xi32>
    %c128_i32 = arith.constant 128 : i32
    %27 = arith.muli %arg2, %c128_i32 : i32
    %28 = vector.broadcast %27 : i32 to vector<1x8x1xi32>
    %29 = arith.subi %26, %28 : vector<1x8x1xi32>
    %c2_i32 = arith.constant 2 : i32
    %30 = vector.broadcast %c2_i32 : i32 to vector<1x8x1xi32>
    %31 = arith.muli %30, %29 : vector<1x8x1xi32>
    %c0_21 = arith.constant 0 : index
    %c0_22 = arith.constant 0 : index
    %c0_23 = arith.constant 0 : index
    %32 = vector.load %arg10[%c0_21, %c0_22, %c0_23] : memref<1x1x256xi32, #tpu.memory_space<vmem>>, vector<1x1x256xi32>
    %33 = vector.broadcast %32 : vector<1x1x256xi32> to vector<1x8x256xi32>
    %34 = vector.broadcast %31 : vector<1x8x1xi32> to vector<1x8x256xi32>
    %35 = arith.cmpi eq, %33, %34 : vector<1x8x256xi32>
    %c0_24 = arith.constant 0 : index
    %c0_25 = arith.constant 0 : index
    %c0_26 = arith.constant 0 : index
    %36 = vector.load %arg8[%c0_24, %c0_25, %c0_26] : memref<1x8x1xf32, #tpu.memory_space<vmem>>, vector<1x8x1xf32>
    %37 = arith.mulf %16, %36 : vector<1x8x1xf32>
    %cst_27 = arith.constant 0.000000e+00 : f32
    %38 = vector.broadcast %cst_27 : f32 to vector<1x8x256xf32>
    %39 = arith.select %35, %19, %38 : vector<1x8x256xi1>, vector<1x8x256xf32>
    %cst_28 = arith.constant dense<0.000000e+00> : vector<1x8xf32>
    %40 = vector.multi_reduction <add>, %39, %cst_28 [2] : vector<1x8x256xf32> to vector<1x8xf32>
    %41 = vector.shape_cast %40 : vector<1x8xf32> to vector<1x8x1xf32>
    %42 = arith.addf %37, %41 : vector<1x8x1xf32>
    %c0_29 = arith.constant 0 : index
    %c0_30 = arith.constant 0 : index
    %c0_31 = arith.constant 0 : index
    %43 = vector.load %arg8[%c0_29, %c0_30, %c0_31] : memref<1x8x1xf32, #tpu.memory_space<vmem>>, vector<1x8x1xf32>
    tpu.vector_store %arg8[%c0_29, %c0_30, %c0_31], %42 {strides = array<i32>} : memref<1x8x1xf32, #tpu.memory_space<vmem>>, vector<1x8x1xf32>,
    %c0_32 = arith.constant 0 : index
    %c0_33 = arith.constant 0 : index
    %c0_34 = arith.constant 0 : index
    %44 = vector.load %arg6[%c0_32, %c0_33, %c0_34] : memref<1x8x1xf32, #tpu.memory_space<vmem>>, vector<1x8x1xf32>
    tpu.vector_store %arg6[%c0_32, %c0_33, %c0_34], %14 {strides = array<i32>} : memref<1x8x1xf32, #tpu.memory_space<vmem>>, vector<1x8x1xf32>,
    %c0_i32_35 = arith.constant 0 : i32
    %45 = arith.cmpi eq, %arg2, %c0_i32_35 : i32
    %46 = arith.extui %45 : i1 to i32
    %c0_i32_36 = arith.constant 0 : i32
    %47 = arith.cmpi ne, %46, %c0_i32_36 : i32
    scf.if %47 {
      %c0_37 = arith.constant 0 : index
      %c0_38 = arith.constant 0 : index
      %c0_39 = arith.constant 0 : index
      %48 = vector.load %arg8[%c0_37, %c0_38, %c0_39] : memref<1x8x1xf32, #tpu.memory_space<vmem>>, vector<1x8x1xf32>
      %cst_40 = arith.constant -2.000000e+00 : f32
      %49 = vector.broadcast %cst_40 : f32 to vector<1x8x1xf32>
      %50 = arith.mulf %49, %48 : vector<1x8x1xf32>
      %c0_41 = arith.constant 0 : index
      %c0_42 = arith.constant 0 : index
      %c0_43 = arith.constant 0 : index
      %51 = vector.load %arg7[%c0_41, %c0_42, %c0_43] : memref<1x8x1xf32, #tpu.memory_space<vmem>>, vector<1x8x1xf32>
      %52 = arith.divf %50, %51 : vector<1x8x1xf32>
      %c0_44 = arith.constant 0 : index
      %c0_45 = arith.constant 0 : index
      %c0_46 = arith.constant 0 : index
      %53 = vector.load %arg5[%c0_44, %c0_45, %c0_46] : memref<1x8x1xf32, #tpu.memory_space<vmem>>, vector<1x8x1xf32>
      tpu.vector_store %arg5[%c0_44, %c0_45, %c0_46], %52 {strides = array<i32>} : memref<1x8x1xf32, #tpu.memory_space<vmem>>, vector<1x8x1xf32>,
    } else {
    }
    return
  }
  func.func @transform_0(%arg0: i32, %arg1: i32, %arg2: i32) -> (i32, i32, i32) {
    %c0_i32 = arith.constant 0 : i32
    return %arg0, %arg1, %arg2 : i32, i32, i32
  }
  func.func @transform_1(%arg0: i32, %arg1: i32, %arg2: i32) -> (i32, i32, i32) {
    %c0_i32 = arith.constant 0 : i32
    %c0_i32_0 = arith.constant 0 : i32
    return %arg0, %arg1, %c0_i32 : i32, i32, i32
  }
  func.func @transform_2(%arg0: i32, %arg1: i32, %arg2: i32) -> (i32, i32, i32) {
    %c0_i32 = arith.constant 0 : i32
    %c0_i32_0 = arith.constant 0 : i32
    return %arg0, %arg1, %c0_i32 : i32, i32, i32
  }
}

</mosaic_0001>

<llo_original>
// kernel: cdq_loss.1
$region0: #{cdq_loss.1}
  #allocation0 [shape = 'u32[]', space=smem, size = 0x4, offset = 0x4, fixed_abs, tag = 'smem constant byte address 0x4 - core index']
  #allocation1 [shape = 'u32[144,128]{1,0:T(1,128)}', space=vmem, size = 0x12000, scoped, tag = 'internal scratch']
  #allocation2 [shape = 'f32[1,8,1]{2,1,0:T(8,128)}', space=vmem, size = 0x1000, scoped, tag = 'scratch operand']
  #allocation3 [shape = 'f32[1,8,1]{2,1,0:T(8,128)}', space=vmem, size = 0x1000, scoped, tag = 'scratch operand']
  #allocation4 [shape = 'f32[1,8,1]{2,1,0:T(8,128)}', space=vmem, size = 0x1000, scoped, tag = 'scratch operand']
  #allocation5 [shape = 'f32[1,1,256]{2,1,0:T(1,128)}', space=vmem, size = 0x400, scoped, tag = 'scratch operand']
  #allocation6 [shape = 's32[1,1,256]{2,1,0:T(1,128)}', space=vmem, size = 0x400, scoped, tag = 'scratch operand']
  %s0 = inlined_call_operand.vmem [shape: f32[2,8,256], index: 0, kind: input, shape index: {}]
  %s1 = inlined_call_operand.vmem [shape: s32[2,8,1], index: 1, kind: input, shape index: {}]
  %s2 = inlined_call_operand.vmem [shape: f32[2,8,1], index: 2, kind: output, shape index: {}]
  %s3 = sld [smem:[#allocation0]]
  $region49: #{cdq_loss.1} parent=0
    _
  %s5 = ssub.s32 1, %s3
  %s6 = scalar_select 0, %s5, %s3
  loop: start=0, step=1, limit=4
  $region2: #{cdq_loss.1} parent=0 // loop_pre_header
    _
  $region3: #{cdq_loss.1} parent=0 // loop_header
    %s8 = sphi 0, %s12
    %p9 = scmp.ge.s32.totalorder %s8, 4
    %s15 = sphi 0, %s34
    %s16 = sphi 0, %s30
    %s17 = sphi 0, %s26
    %s18 = sphi 0, %s15
    %s19 = sphi 0, %s16
    %s20 = sphi 0, %s17
    %s21 = sphi 0, %s18
    %s22 = sphi 0, %s19
    %s23 = sphi 0, %s20
    %s41 = sphi 0, %s43
    %s44 = sphi 0, %s41
    %s45 = sphi 0, %s44
    %s61 = sphi 0, %s45
    %s69 = sphi 0, %s71
    %s72 = sphi 0, %s69
    %s73 = sphi 0, %s72
    %s89 = sphi 0, %s73
    %s97 = sphi 0, %s99
    %s100 = sphi 0, %s97
    %s101 = sphi 0, %s100
    %s117 = sphi 0, %s101
  $region4: #{cdq_loss.1} parent=0 // loop_header_branch
    %11 = sbr.rel (%p9) target = $region8
  $region5: #{cdq_loss.1} parent=0 // loop_body
    %s13 = ssub.s32 %s8, 1
    %s14 = ssub.s32 %s8, 2
    %s24 = sadd.s32 1, %s17
    %p25 = scmp.ge.s32.totalorder %s24, 1
    %s26 = scalar_select %p25, 0, %s24
    %s27 = sadd.s32 1, %s16
    %s28 = scalar_select %p25, %s27, %s16
    %p29 = scmp.ge.s32.totalorder %s28, 1
    %s30 = scalar_select %p29, 0, %s28
    %s31 = sadd.s32 1, %s15
    %s32 = scalar_select %p29, %s31, %s15
    %p33 = scmp.ge.s32.totalorder %s32, 2
    %s34 = scalar_select %p33, 0, %s32
    %s35 = ssub.s32 %s15, %s34
    %s36 = ssub.s32 %s16, %s30
    %s37 = sor.u32 %s35, %s36
    %s38 = ssub.s32 %s17, %s26
    %s39 = sor.u32 %s37, %s38
    %p40 = scmp.eq.s32.totalorder %s39, 0
    %s42 = sadd.s32 %s41, 1
    %s43 = scalar_select %p40, %s41, %s42
    %p46 = pneg %p40
    %p47 = scmp.eq.s32.totalorder %s8, 1
    %p48 = por %p46, %p47
    %p49 = scmp.ne.s32.totalorder %s41, %s44
    %p50 = scmp.eq.s32.totalorder %s8, 0
    %p51 = por %p49, %p50
    %p52 = scmp.ne.s32.totalorder %s41, %s44
    %p53 = scmp.eq.s32.totalorder %s13, 1
    %p54 = por %p52, %p53
    %p55 = scmp.ne.s32.totalorder %s44, %s45
    %p56 = scmp.eq.s32.totalorder %s13, 0
    %p57 = por %p55, %p56
    %p58 = scmp.ne.s32.totalorder %s44, %s45
    %p59 = scmp.eq.s32.totalorder %s14, 1
    %p60 = por %p58, %p59
    %p62 = scmp.ne.s32.totalorder %s45, %s61
    %p63 = scmp.eq.s32.totalorder %s14, 0
    %p64 = por %p62, %p63
    %s65 = ssub.s32 %s15, %s34
    %s66 = ssub.s32 %s16, %s30
    %s67 = sor.u32 %s65, %s66
    %p68 = scmp.eq.s32.totalorder %s67, 0
    %s70 = sadd.s32 %s69, 1
    %s71 = scalar_select %p68, %s69, %s70
    %p74 = pneg %p68
    %p75 = scmp.eq.s32.totalorder %s8, 1
    %p76 = por %p74, %p75
    %p77 = scmp.ne.s32.totalorder %s69, %s72
    %p78 = scmp.eq.s32.totalorder %s8, 0
    %p79 = por %p77, %p78
    %p80 = scmp.ne.s32.totalorder %s69, %s72
    %p81 = scmp.eq.s32.totalorder %s13, 1
    %p82 = por %p80, %p81
    %p83 = scmp.ne.s32.totalorder %s72, %s73
    %p84 = scmp.eq.s32.totalorder %s13, 0
    %p85 = por %p83, %p84
    %p86 = scmp.ne.s32.totalorder %s72, %s73
    %p87 = scmp.eq.s32.totalorder %s14, 1
    %p88 = por %p86, %p87
    %p90 = scmp.ne.s32.totalorder %s73, %s89
    %p91 = scmp.eq.s32.totalorder %s14, 0
    %p92 = por %p90, %p91
    %s93 = ssub.s32 %s15, %s34
    %s94 = ssub.s32 %s16, %s30
    %s95 = sor.u32 %s93, %s94
    %p96 = scmp.eq.s32.totalorder %s95, 0
    %s98 = sadd.s32 %s97, 1
    %s99 = scalar_select %p96, %s97, %s98
    %p102 = pneg %p96
    %p103 = scmp.eq.s32.totalorder %s8, 1
    %p104 = por %p102, %p103
    %p105 = scmp.ne.s32.totalorder %s97, %s100
    %p106 = scmp.eq.s32.totalorder %s8, 0
    %p107 = por %p105, %p106
    %p108 = scmp.ne.s32.totalorder %s97, %s100
    %p109 = scmp.eq.s32.totalorder %s13, 1
    %p110 = por %p108, %p109
    %p111 = scmp.ne.s32.totalorder %s100, %s101
    %p112 = scmp.eq.s32.totalorder %s13, 0
    %p113 = por %p111, %p112
    %p114 = scmp.ne.s32.totalorder %s100, %s101
    %p115 = scmp.eq.s32.totalorder %s14, 1
    %p116 = por %p114, %p115
    %p118 = scmp.ne.s32.totalorder %s101, %s117
    %p119 = scmp.eq.s32.totalorder %s14, 0
    %p120 = por %p118, %p119
    %p121 = scmp.le.s32.totalorder 1, %s8
    %p122 = scmp.lt.s32.totalorder %s8, 3
    %p123 = pnand %p121, %p122
    %p124 = pneg %p123
    // Predicated region
    $region9: #{cdq_loss.1} parent=5 // pred_check
      _
    $region10: #{cdq_loss.1} parent=5 // pred_check_branch
      %126 = sbr.rel (%p123) target = $region12
    $region11: #{cdq_loss.1} parent=5 // pred_region
      %s127 = ssub.s32 %s8, 1
    $region12: #{cdq_loss.1} parent=5 // pred_fallthru
      _
    %p128 = scmp.lt.s32.totalorder %s8, 2
    // Predicated region
    $region13: #{cdq_loss.1} parent=5 // pred_check
      %p129 = pneg %p128
    $region14: #{cdq_loss.1} parent=5 // pred_check_branch
      %131 = sbr.rel (%p129) target = $region16
    $region15: #{cdq_loss.1} parent=5 // pred_region
      // Predicated region
      $region17: #{cdq_loss.1} parent=15 // pred_check
        %p132 = pneg %p51
      $region18: #{cdq_loss.1} parent=15 // pred_check_branch
        %134 = sbr.rel (%p132) target = $region20
      $region19: #{cdq_loss.1} parent=15 // pred_region
        %s135 = smul.u32 2, %s17
        %p136 = scmp.lt.s32.totalorder %s15, 1
        %s137 = scalar_select %p136, %s15, 1
        %p138 = scmp.lt.s32.totalorder %s16, 0
        %s139 = scalar_select %p138, %s16, 0
        %p140 = scmp.lt.s32.totalorder %s135, 1
        %s141 = scalar_select %p140, %s135, 1
        %s142 = smul.addr %s139, 2
        %s143 = sadd.s32 %s141, %s142
        %s144 = smul.addr %s137, 2
        %s145 = sadd.s32 %s143, %s144
        %s146 = smul.addr %s145, 8
        %s147 = scalar_lea.vmem %s0, %s146
        %s148 = smul.u32 2, %s17
      $region20: #{cdq_loss.1} parent=15 // pred_fallthru
        _
      // Predicated region
      $region21: #{cdq_loss.1} parent=15 // pred_check
        %p149 = pneg %p79
      $region22: #{cdq_loss.1} parent=15 // pred_check_branch
        %151 = sbr.rel (%p149) target = $region24
      $region23: #{cdq_loss.1} parent=15 // pred_region
        %p152 = scmp.lt.s32.totalorder %s15, 1
        %s153 = scalar_select %p152, %s15, 1
        %p154 = scmp.lt.s32.totalorder %s16, 0
        %s155 = scalar_select %p154, %s16, 0
        %s156 = sadd.s32 %s155, %s153
        %s157 = smul.addr %s156, 8
        %s158 = scalar_lea.vmem %s1, %s157
      $region24: #{cdq_loss.1} parent=15 // pred_fallthru
        _
    $region16: #{cdq_loss.1} parent=5 // pred_fallthru
      _
    %p159 = scmp.le.s32.totalorder 1, %s8
    %p160 = scmp.lt.s32.totalorder %s8, 3
    %p161 = pnand %p159, %p160
    %p162 = pneg %p161
    // Predicated region
    $region25: #{cdq_loss.1} parent=5 // pred_check
      _
    $region26: #{cdq_loss.1} parent=5 // pred_check_branch
      %164 = sbr.rel (%p161) target = $region28
    $region27: #{cdq_loss.1} parent=5 // pred_region
      %s165 = ssub.s32 %s8, 1
      %s166 = smul.u32 2, %s20
      %p167 = scmp.lt.s32.totalorder %s18, 1
      %s168 = scalar_select %p167, %s18, 1
      %p169 = scmp.lt.s32.totalorder %s19, 0
      %s170 = scalar_select %p169, %s19, 0
      %p171 = scmp.lt.s32.totalorder %s166, 1
      %s172 = scalar_select %p171, %s166, 1
      %s173 = smul.addr %s170, 2
      %s174 = sadd.s32 %s172, %s173
      %s175 = smul.addr %s168, 2
      %s176 = sadd.s32 %s174, %s175
      %s177 = smul.addr %s176, 8
      %s178 = scalar_lea.vmem %s0, %s177
      %p179 = pneg %p57
      %p180 = pneg %p54
      %p181 = scmp.lt.s32.totalorder %s18, 1
      %s182 = scalar_select %p181, %s18, 1
      %p183 = scmp.lt.s32.totalorder %s19, 0
      %s184 = scalar_select %p183, %s19, 0
      %s185 = sadd.s32 %s184, %s182
      %s186 = smul.addr %s185, 8
      %s187 = scalar_lea.vmem %s1, %s186
      %p188 = pneg %p85
      %p189 = pneg %p82
      %p190 = pneg %p113
      %p191 = pneg %p110
      %p192 = scmp.lt.s32.totalorder %s18, 1
      %s193 = scalar_select %p192, %s18, 1
      %p194 = scmp.lt.s32.totalorder %s19, 0
      %s195 = scalar_select %p194, %s19, 0
      %s196 = sadd.s32 %s195, %s193
      %s197 = smul.addr %s196, 8
      %s198 = scalar_lea.vmem %s2, %s197
      %s199 = smul.u32 2, %s20
      %p200 = scmp.lt.s32.totalorder %s18, 1
      %s201 = scalar_select %p200, %s18, 1
      %p202 = scmp.lt.s32.totalorder %s19, 0
      %s203 = scalar_select %p202, %s19, 0
      %p204 = scmp.lt.s32.totalorder %s199, 1
      %s205 = scalar_select %p204, %s199, 1
      %s206 = smul.addr %s203, 2
      %s207 = sadd.s32 %s205, %s206
      %s208 = smul.addr %s201, 2
      %s209 = sadd.s32 %s207, %s208
      %s210 = smul.addr %s209, 8
      %s211 = scalar_lea.vmem %s0, %s210
      %s212 = smul.u32 2, %s20
      %p213 = scmp.lt.s32.totalorder %s18, 1
      %s214 = scalar_select %p213, %s18, 1
      %p215 = scmp.lt.s32.totalorder %s19, 0
      %s216 = scalar_select %p215, %s19, 0
      %s217 = sadd.s32 %s216, %s214
      %s218 = smul.addr %s217, 8
      %s219 = scalar_lea.vmem %s1, %s218
      %p220 = scmp.lt.s32.totalorder %s18, 1
      %s221 = scalar_select %p220, %s18, 1
      %p222 = scmp.lt.s32.totalorder %s19, 0
      %s223 = scalar_select %p222, %s19, 0
      %s224 = sadd.s32 %s223, %s221
      %s225 = smul.addr %s224, 8
      %s226 = scalar_lea.vmem %s2, %s225
      %p227 = scmp.eq.s32.totalorder %s20, 0
      // Predicated region
      $region29: #{cdq_loss.1} parent=27 // pred_check
        %p228 = pneg %p227
      $region30: #{cdq_loss.1} parent=27 // pred_check_branch
        %230 = sbr.rel (%p228) target = $region32
      $region31: #{cdq_loss.1} parent=27 // pred_region
        %vm231 = vcmask 7168
        %232 = vst.msk [vmem:[#allocation2] sm:$0xff] %vm231, -inf
        %233 = vst.msk [vmem:[#allocation3] sm:$0xff] %vm231, 0.0
        %234 = vst.msk [vmem:[#allocation4] sm:$0xff] %vm231, 0.0
        %v235 = vlaneseq
        %v236 = vand.u32 %v235, 127
        %v237 = vadd.s32 %v236, 128
        %v238 = vcombine.low %v236, %v237
        %v240 = vunpack.c.l.s4 1966171168
        %v241 = vunpack.c.0.s8 %v240
        %v242 = vlaneseq
        %v243 = vshrl.u32 %v242, 7
        %v244 = vsub.s32 %v241, %v243
        %v245 = vrot.slane %v238, %v244
        %v247 = vunpack.c.l.s4 1966171168
        %v248 = vunpack.c.0.s8 %v247
        %v249 = vlaneseq
        %v250 = vshrl.u32 %v249, 7
        %v251 = vsub.s32 %v248, %v250
        %v252 = vrot.slane %v245, %v251
        %v253 = vlaneseq
        %vm254 = vcmp.ge.s32.totalorder %v253, 0
        %vm255 = vcmp.lt.s32.totalorder %v253, 256
        %vm256 = vmand %vm254, %vm255
        %257 = vst.msk [vmem:[#allocation6] sm:$0x3] %vm256, %v252
        %v258 = vand.u32 %v236, 1
        %v259 = vand.u32 %v237, 1
        %vm260 = vcmp.eq.s32.totalorder %v258, 0
        %vm261 = vcmp.eq.s32.totalorder %v259, 0
        %v262 = vsel %vm260, 1.0, 0.0
        %v263 = vsel %vm261, 1.0, 0.0
        %v266 = vcombine.low %v262, %v263
        %v268 = vunpack.c.l.s4 1966171168
        %v269 = vunpack.c.0.s8 %v268
        %v270 = vlaneseq
        %v271 = vshrl.u32 %v270, 7
        %v272 = vsub.s32 %v269, %v271
        %v273 = vrot.slane %v266, %v272
        %v275 = vunpack.c.l.s4 1966171168
        %v276 = vunpack.c.0.s8 %v275
        %v277 = vlaneseq
        %v278 = vshrl.u32 %v277, 7
        %v279 = vsub.s32 %v276, %v278
        %v280 = vrot.slane %v273, %v279
        %282 = vst.msk [vmem:[#allocation5] sm:$0x3] %vm256, %v280
      $region32: #{cdq_loss.1} parent=27 // pred_fallthru
        _
      %v283 = vld [vmem:[%s211] sm:$0xff]
      %v284 = vld [vmem:[%s211 + $0x8] sm:$0xff]
      %v285 = vld [vmem:[#allocation5] sm:$0x3]
      %vm286 = vcmp.ne.f32.partialorder %v285, 0.0
      %v287 = vsel %vm286, 1, 0
      %v288 = vlaneseq
      %v289 = vshrl.u32 %v288, 7
      %v290 = vsub.s32 0, %v289
      %v291 = vrot.slane %v287, %v290
      %v292 = vlaneseq
      %v293 = vshrl.u32 %v292, 7
      %v294 = vsub.s32 1, %v293
      %v295 = vrot.slane %v287, %v294
      %vm296 = vcmp.eq.s32.totalorder %v291, 1
      %vm297 = vcmp.eq.s32.totalorder %v295, 1
      %v298 = vsel %vm296, %v283, -inf
      %v299 = vsel %vm297, %v284, -inf
      %v300 = vld [vmem:[#allocation2] sm:$0xff]
      %v301 = vmax.f32 %v298, %v299
      %302 = vmax.xlane.f32.xlu0 %v301
      %v303 = vpop.xlane.xlu0 %302
      %v304 = vmax.f32 %v300, %v303
      %v305 = vsub.f32 %v300, %v304
      %v306 = vmul.f32 %v305, 1.442695
      %v307 = vpow.pop %v306
      %309 = vset.pattern.permute.xlu0 0
      %310 = vperm.xlu0 %309, %v304
      %v311 = vpop.permute.xlu0 %310
      %v313 = vsub.f32 %v298, %v311
      %v314 = vsub.f32 %v299, %v311
      %v315 = vmul.f32 %v313, 1.442695
      %v316 = vpow.pop %v315
      %v317 = vmul.f32 %v314, 1.442695
      %v318 = vpow.pop %v317
      %v319 = vld [vmem:[#allocation3] sm:$0xff]
      %v320 = vmul.f32 %v307, %v319
      %v321 = vadd.f32 %v316, %v318
      %322 = vadd.xlane.f32.xlu0 %v321
      %v323 = vpop.xlane.xlu0 %322
      %v324 = vadd.f32 %v320, %v323
      %vm325 = vcmask 7168
      %326 = vst.msk [vmem:[#allocation3] sm:$0xff] %vm325, %v324
      %v327 = vld [vmem:[%s219] sm:$0xff]
      %s328 = smul.u32 %s20, 128
      %v329 = vstv %s328
      %v330 = vsub.s32 %v327, %v329
      %v331 = vmul.u32 %v330, 2
      %v332 = vld [vmem:[#allocation6] sm:$0x3]
      %v333 = vlaneseq
      %v334 = vshrl.u32 %v333, 7
      %v335 = vsub.s32 0, %v334
      %v336 = vrot.slane %v332, %v335
      %v337 = vlaneseq
      %v338 = vshrl.u32 %v337, 7
      %v339 = vsub.s32 1, %v338
      %v340 = vrot.slane %v332, %v339
      %341 = vset.pattern.permute.xlu0 0
      %342 = vperm.xlu0 %341, %v331
      %v343 = vpop.permute.xlu0 %342
      %vm344 = vcmp.eq.s32.totalorder %v336, %v343
      %vm345 = vcmp.eq.s32.totalorder %v340, %v343
      %v346 = vld [vmem:[#allocation4] sm:$0xff]
      %v347 = vmul.f32 %v307, %v346
      %v348 = vsel %vm344, %v316, 0.0
      %v349 = vsel %vm345, %v318, 0.0
      %v350 = vadd.f32 %v348, %v349
      %351 = vadd.xlane.f32.xlu0 %v350
      %v352 = vpop.xlane.xlu0 %351
      %v353 = vadd.f32 %v347, %v352
      %354 = vst.msk [vmem:[#allocation4] sm:$0xff] %vm325, %v353
      %355 = vst.msk [vmem:[#allocation2] sm:$0xff] %vm325, %v304
      // Predicated region
      $region33: #{cdq_loss.1} parent=27 // pred_check
        %p356 = pneg %p227
      $region34: #{cdq_loss.1} parent=27 // pred_check_branch
        %358 = sbr.rel (%p356) target = $region36
      $region35: #{cdq_loss.1} parent=27 // pred_region
        %v359 = vld [vmem:[#allocation4] sm:$0xff]
        %v360 = vmul.f32 %v359, -2.0
        %v361 = vld [vmem:[#allocation3] sm:$0xff]
        %v362 = vrcp.pop %v361
        %v363 = vmul.f32 %v360, %v362
        %364 = vst.msk [vmem:[%s226] sm:$0xff] %vm325, %v363
      $region36: #{cdq_loss.1} parent=27 // pred_fallthru
        _
      %p365 = scmp.lt.s32.totalorder %s18, 1
      %s366 = scalar_select %p365, %s18, 1
      %p367 = scmp.lt.s32.totalorder %s19, 0
      %s368 = scalar_select %p367, %s19, 0
      %s369 = sadd.s32 %s368, %s366
      %s370 = smul.addr %s369, 8
      %s371 = scalar_lea.vmem %s2, %s370
      // Predicated region
      $region37: #{cdq_loss.1} parent=27 // pred_check
        %p372 = pneg %p110
      $region38: #{cdq_loss.1} parent=27 // pred_check_branch
        %374 = sbr.rel (%p372) target = $region40
      $region39: #{cdq_loss.1} parent=27 // pred_region
        _
      $region40: #{cdq_loss.1} parent=27 // pred_fallthru
        _
    $region28: #{cdq_loss.1} parent=5 // pred_fallthru
      _
    %p375 = scmp.le.s32.totalorder 2, %s8
    // Predicated region
    $region41: #{cdq_loss.1} parent=5 // pred_check
      %p376 = pneg %p375
    $region42: #{cdq_loss.1} parent=5 // pred_check_branch
      %378 = sbr.rel (%p376) target = $region44
    $region43: #{cdq_loss.1} parent=5 // pred_region
      %s379 = ssub.s32 %s8, 2
      // Predicated region
      $region45: #{cdq_loss.1} parent=43 // pred_check
        %p380 = pneg %p116
      $region46: #{cdq_loss.1} parent=43 // pred_check_branch
        %382 = sbr.rel (%p380) target = $region48
      $region47: #{cdq_loss.1} parent=43 // pred_region
        %p383 = scmp.lt.s32.totalorder %s21, 1
        %s384 = scalar_select %p383, %s21, 1
        %p385 = scmp.lt.s32.totalorder %s22, 0
        %s386 = scalar_select %p385, %s22, 0
        %s387 = sadd.s32 %s386, %s384
        %s388 = smul.addr %s387, 8
        %s389 = scalar_lea.vmem %s2, %s388
      $region48: #{cdq_loss.1} parent=43 // pred_fallthru
        _
    $region44: #{cdq_loss.1} parent=5 // pred_fallthru
      _
  $region6: #{cdq_loss.1} parent=0 // loop_footer
    %s12 = sadd.s32 1, %s8
  $region7: #{cdq_loss.1} parent=0 // loop_footer_branch
    %7 = sbr.rel target = $region3
  $region8: #{cdq_loss.1} parent=0 // loop_exit
    _

</llo_original>
